<compile_context>
chip_gen: v5e
topology: v5e:2x2
jax: 0.10.0
libtpu: 0.0.40
codegen_flags: <defaults>
</compile_context>

<pallas_src>
import jax
import jax.numpy as jnp
from jax.experimental import pallas as pl
from jax.experimental.pallas import tpu as pltpu


def _mlp_kernel(r_ref, s_ref, d_ref, t_ref,
                w1r_ref, w1s_ref, w1d_ref, w1t_ref, b1_ref,
                w2_ref, b2_ref, w3_ref, b3_ref,
                o_ref):
    # ---- fc1 with torch.cat fused as partial products ----------------------
    # Wide route block on the MXU.  Cast the streamed activations to the
    # (bf16) weight dtype in-kernel; accumulation is f32.
    r = r_ref[...].astype(w1r_ref.dtype)
    h1 = jnp.dot(r, w1r_ref[...], preferred_element_type=jnp.float32)

    # Width-1 / width-2 feature blocks on the VPU (broadcast mul-adds, f32).
    s = s_ref[...]                       # (TM, 1)
    t = t_ref[...]                       # (TM, 1)
    d = d_ref[...]                       # (TM, Dw)
    w1d = w1d_ref[...]                   # (Dw, H1)
    h1 = h1 + s * w1s_ref[...] + t * w1t_ref[...]
    for j in range(d.shape[1]):          # static unroll over the tiny day width
        h1 = h1 + d[:, j:j + 1] * w1d[j:j + 1, :]

    h1 = jnp.maximum(h1 + b1_ref[...], 0.0)           # relu(fc1), f32

    # ---- fc2 ----------------------------------------------------------------
    h2 = jnp.dot(h1.astype(w2_ref.dtype), w2_ref[...],
                 preferred_element_type=jnp.float32)
    h2 = jnp.maximum(h2 + b2_ref[...], 0.0)            # relu(fc2), f32

    # ---- fc3 (out_features == 1): VPU multiply + lane reduction -------------
    out = jnp.sum(h2 * w3_ref[...], axis=-1, keepdims=True) + b3_ref[...]
    o_ref[...] = out.astype(o_ref.dtype)


def _round_up(x, m):
    return ((x + m - 1) // m) * m


def _choose_batch_tile(B, block_b):
    """Large tiles (amortize per-step overhead) but keep n_tiles >= 2 for big
    batches so ("parallel",) can shard across both v7x TensorCores."""
    Br = _round_up(B, 8)
    block_b = max(8, _round_up(block_b, 8))
    if Br <= block_b:
        if Br > 1024:
            # fits in one tile but is big enough to split across two cores
            return min(Br, _round_up((Br + 1) // 2, 256))
        return Br
    return _round_up(block_b, 256) if block_b >= 256 else block_b


def arrival_time_forward(route_ids, stop_ids, day_features, scheduled_time, params,
                         *, block_b=4096, matmul_dtype=jnp.bfloat16):
    """Pallas implementation of ArrivalTimeModel.forward.

    Weights are stored (in_features, out_features), i.e. transposed vs PyTorch.
    """
    w1, b1, w2, b2, w3, b3 = params
    B, R = route_ids.shape
    S = stop_ids.shape[1]
    Dw = day_features.shape[1]
    T = scheduled_time.shape[1]
    H1, H2, HO = w1.shape[1], w2.shape[1], w3.shape[1]
    assert w1.shape[0] == R + S + Dw + T, "W1 rows must match concatenated feature width"
    assert S == 1 and T == 1 and HO == 1, "kernel specializes width-1 blocks / scalar output"

    # Split W1 row blocks to fuse torch.cat; feature order stays
    # [route_ids, stop_ids, day_features, scheduled_time].
    w1r = w1[:R].astype(matmul_dtype)            # MXU operand (tiny one-time cast)
    w1s = w1[R:R + S]
    w1d = w1[R + S:R + S + Dw]
    w1t = w1[R + S + Dw:]
    w2c = w2.astype(matmul_dtype)                # MXU operand

    b1r = b1.reshape(1, H1)
    b2r = b2.reshape(1, H2)
    w3row = w3.reshape(1, H2)                    # (H2, 1) -> (1, H2) for the VPU reduce
    b3r = b3.reshape(1, 1)

    tm = _choose_batch_tile(B, block_b)
    n_tiles = pl.cdiv(B, tm)                     # partial last block masked by Pallas

    row_spec = lambda w: pl.BlockSpec((tm, w), lambda i: (i, 0))       # streamed per tile
    const_spec = lambda shape: pl.BlockSpec(shape, lambda i: (0, 0))   # VMEM-resident

    # Rough VMEM footprint; only pass an explicit limit if a user pushes block_b
    # far past the defaults (v5e scoped default is 16 MiB of 128).
    mm_bytes = jnp.dtype(matmul_dtype).itemsize
    est = (2 * tm * (R + S + Dw + T) * 4         # double-buffered input tiles (f32)
           + 2 * tm * HO * 4                     # double-buffered output tile
           + tm * (H1 + H2) * 4                  # h1 / h2 temporaries
           + (R * H1 + H1 * H2) * mm_bytes       # MXU-resident weights
           + (S + Dw + T + 1) * H1 * 4 + (2 * H2 + 1) * 4)
    cp_kwargs = dict(dimension_semantics=("parallel",))
    if est > 12 * 1024 * 1024:
        cp_kwargs["vmem_limit_bytes"] = int(min(2 * est, 48 * 1024 * 1024))
    compiler_params = pltpu.CompilerParams(**cp_kwargs)

    out = pl.pallas_call(
        _mlp_kernel,
        out_shape=jax.ShapeDtypeStruct((B, HO), jnp.float32),
        grid=(n_tiles,),
        in_specs=[
            row_spec(R), row_spec(S), row_spec(Dw), row_spec(T),
            const_spec((R, H1)), const_spec((S, H1)), const_spec((Dw, H1)),
            const_spec((T, H1)), const_spec((1, H1)),
            const_spec((H1, H2)), const_spec((1, H2)),
            const_spec((1, H2)), const_spec((1, 1)),
        ],
        out_specs=row_spec(HO),
        compiler_params=compiler_params,
    )(route_ids, stop_ids, day_features, scheduled_time,
      w1r, w1s, w1d, w1t, b1r, w2c, b2r, w3row, b3r)
    return out


def init_params(key, num_routes):
    """fc1: (num_routes+4)->64, fc2: 64->32, fc3: 32->1. Weights stored (in, out)."""
    f_in = num_routes + 4
    k = jax.random.split(key, 6)
    scale = lambda fan_in: 1.0 / jnp.sqrt(jnp.float32(fan_in))
    w1 = jax.random.uniform(k[0], (f_in, 64), jnp.float32, -1, 1) * scale(f_in)
    b1 = jax.random.uniform(k[1], (64,), jnp.float32, -1, 1) * scale(f_in)
    w2 = jax.random.uniform(k[2], (64, 32), jnp.float32, -1, 1) * scale(64)
    b2 = jax.random.uniform(k[3], (32,), jnp.float32, -1, 1) * scale(64)
    w3 = jax.random.uniform(k[4], (32, 1), jnp.float32, -1, 1) * scale(32)
    b3 = jax.random.uniform(k[5], (1,), jnp.float32, -1, 1) * scale(32)
    return (w1, b1, w2, b2, w3, b3)


def reference_forward(route_ids, stop_ids, day_features, scheduled_time, params):
    """Pure-JAX reference of the PyTorch forward (HIGHEST precision so the f32
    baseline really is f32 on TPU)."""
    w1, b1, w2, b2, w3, b3 = params
    hp = jax.lax.Precision.HIGHEST
    x = jnp.concatenate([route_ids, stop_ids, day_features, scheduled_time], axis=1)
    x = jnp.maximum(jnp.dot(x, w1, precision=hp) + b1, 0.0)
    x = jnp.maximum(jnp.dot(x, w2, precision=hp) + b2, 0.0)
    return jnp.dot(x, w3, precision=hp) + b3


if __name__ == "__main__":
    key = jax.random.PRNGKey(0)
    k_p, k_r, k_s, k_d, k_t = jax.random.split(key, 5)

    num_routes = 12      # concatenated feature dim = num_routes + 4 = 16
    batch = 8

    params = init_params(k_p, num_routes)

    def make_inputs(kr, ks, kd, kt, b):
        route_ids = jax.nn.one_hot(
            jax.random.randint(kr, (b,), 0, num_routes), num_routes, dtype=jnp.float32)
        stop_ids = jax.random.uniform(ks, (b, 1), jnp.float32)
        day_features = jax.random.uniform(kd, (b, 2), jnp.float32)
        scheduled_time = jax.random.uniform(kt, (b, 1), jnp.float32)
        return route_ids, stop_ids, day_features, scheduled_time

    fwd = jax.jit(arrival_time_forward, static_argnames=("block_b", "matmul_dtype"))

    # -- small batch, default bf16-MXU-operand path (f32 accumulation) --------
    inputs = make_inputs(k_r, k_s, k_d, k_t, batch)
    out = jax.block_until_ready(fwd(*inputs, params))
    ref = reference_forward(*inputs, params)
    assert out.shape == (batch, 1)
    assert jnp.allclose(out, ref, atol=5e-2, rtol=5e-2), "bf16 kernel mismatch vs reference"

    # -- small batch, f32 MXU path ---------------------------------------------
    out_f32 = jax.block_until_ready(
        fwd(*inputs, params, matmul_dtype=jnp.float32))
    assert out_f32.shape == (batch, 1)
    assert jnp.allclose(out_f32, ref, atol=1e-4, rtol=1e-4), "f32 kernel mismatch vs reference"

    # -- multi-tile grid + partial last block (520 rows, 256-row tiles) --------
    k_r2, k_s2, k_d2, k_t2 = jax.random.split(jax.random.PRNGKey(1), 4)
    big_inputs = make_inputs(k_r2, k_s2, k_d2, k_t2, 520)
    out_big = jax.block_until_ready(
        fwd(*big_inputs, params, block_b=256, matmul_dtype=jnp.float32))
    ref_big = reference_forward(*big_inputs, params)
    assert out_big.shape == (520, 1)
    assert jnp.allclose(out_big, ref_big, atol=1e-4, rtol=1e-4), \
        "multi-tile / partial-block kernel mismatch vs reference"

    print("KERNEL_OK")
</pallas_src>

<mosaic_0001>
module attributes {stable_mosaic.version = 11 : i64} {
  func.func @_mlp_kernel(%arg0: i32, %arg1: memref<8x12xf32, #tpu.memory_space<vmem>>, %arg2: memref<8x1xf32, #tpu.memory_space<vmem>>, %arg3: memref<8x2xf32, #tpu.memory_space<vmem>>, %arg4: memref<8x1xf32, #tpu.memory_space<vmem>>, %arg5: memref<12x64xbf16, #tpu.memory_space<vmem>>, %arg6: memref<1x64xf32, #tpu.memory_space<vmem>>, %arg7: memref<2x64xf32, #tpu.memory_space<vmem>>, %arg8: memref<1x64xf32, #tpu.memory_space<vmem>>, %arg9: memref<1x64xf32, #tpu.memory_space<vmem>>, %arg10: memref<64x32xbf16, #tpu.memory_space<vmem>>, %arg11: memref<1x32xf32, #tpu.memory_space<vmem>>, %arg12: memref<1x32xf32, #tpu.memory_space<vmem>>, %arg13: memref<1x1xf32, #tpu.memory_space<vmem>>, %arg14: memref<8x1xf32, #tpu.memory_space<vmem>>) attributes {dimension_semantics = [#tpu.dimension_semantics<parallel>], iteration_bounds = array<i64: 1>, scalar_prefetch = 0 : i64, scratch_operands = 0 : i64, tpu.core_type = #tpu.core_type<tc>, window_params = [{transform_indices = @transform_0, window_bounds = array<i64: 8, 12>}, {transform_indices = @transform_1, window_bounds = array<i64: 8, 1>}, {transform_indices = @transform_2, window_bounds = array<i64: 8, 2>}, {transform_indices = @transform_3, window_bounds = array<i64: 8, 1>}, {pipeline_mode = #tpu.pipeline_mode<synchronous>, transform_indices = @transform_4, window_bounds = array<i64: 12, 64>}, {pipeline_mode = #tpu.pipeline_mode<synchronous>, transform_indices = @transform_5, window_bounds = array<i64: 1, 64>}, {pipeline_mode = #tpu.pipeline_mode<synchronous>, transform_indices = @transform_6, window_bounds = array<i64: 2, 64>}, {pipeline_mode = #tpu.pipeline_mode<synchronous>, transform_indices = @transform_7, window_bounds = array<i64: 1, 64>}, {pipeline_mode = #tpu.pipeline_mode<synchronous>, transform_indices = @transform_8, window_bounds = array<i64: 1, 64>}, {pipeline_mode = #tpu.pipeline_mode<synchronous>, transform_indices = @transform_9, window_bounds = array<i64: 64, 32>}, {pipeline_mode = #tpu.pipeline_mode<synchronous>, transform_indices = @transform_10, window_bounds = array<i64: 1, 32>}, {pipeline_mode = #tpu.pipeline_mode<synchronous>, transform_indices = @transform_11, window_bounds = array<i64: 1, 32>}, {pipeline_mode = #tpu.pipeline_mode<synchronous>, transform_indices = @transform_12, window_bounds = array<i64: 1, 1>}, {transform_indices = @transform_13, window_bounds = array<i64: 8, 1>}]} {
    %c0 = arith.constant 0 : index
    %c0_0 = arith.constant 0 : index
    %0 = vector.load %arg1[%c0, %c0_0] : memref<8x12xf32, #tpu.memory_space<vmem>>, vector<8x12xf32>
    %1 = arith.truncf %0 : vector<8x12xf32> to vector<8x12xbf16>
    %c0_1 = arith.constant 0 : index
    %c0_2 = arith.constant 0 : index
    %2 = vector.load %arg5[%c0_1, %c0_2] : memref<12x64xbf16, #tpu.memory_space<vmem>>, vector<12x64xbf16>
    %cst = arith.constant dense<0.000000e+00> : vector<8x64xf32>
    %3 = tpu.matmul %1, %2, %cst {dimension_numbers = #tpu.dot_dimension_numbers<[1], [0], [0], [1], [0, 0, 1, 1], [], []>} : vector<8x12xbf16>, vector<12x64xbf16>, vector<8x64xf32> -> vector<8x64xf32>
    %c0_3 = arith.constant 0 : index
    %c0_4 = arith.constant 0 : index
    %4 = vector.load %arg2[%c0_3, %c0_4] : memref<8x1xf32, #tpu.memory_space<vmem>>, vector<8x1xf32>
    %c0_5 = arith.constant 0 : index
    %c0_6 = arith.constant 0 : index
    %5 = vector.load %arg4[%c0_5, %c0_6] : memref<8x1xf32, #tpu.memory_space<vmem>>, vector<8x1xf32>
    %c0_7 = arith.constant 0 : index
    %c0_8 = arith.constant 0 : index
    %6 = vector.load %arg3[%c0_7, %c0_8] : memref<8x2xf32, #tpu.memory_space<vmem>>, vector<8x2xf32>
    %c0_9 = arith.constant 0 : index
    %c0_10 = arith.constant 0 : index
    %7 = vector.load %arg7[%c0_9, %c0_10] : memref<2x64xf32, #tpu.memory_space<vmem>>, vector<2x64xf32>
    %c0_11 = arith.constant 0 : index
    %c0_12 = arith.constant 0 : index
    %8 = vector.load %arg6[%c0_11, %c0_12] : memref<1x64xf32, #tpu.memory_space<vmem>>, vector<1x64xf32>
    %9 = vector.broadcast %4 : vector<8x1xf32> to vector<8x64xf32>
    %10 = vector.broadcast %8 : vector<1x64xf32> to vector<8x64xf32>
    %11 = arith.mulf %9, %10 : vector<8x64xf32>
    %12 = arith.addf %3, %11 : vector<8x64xf32>
    %c0_13 = arith.constant 0 : index
    %c0_14 = arith.constant 0 : index
    %13 = vector.load %arg8[%c0_13, %c0_14] : memref<1x64xf32, #tpu.memory_space<vmem>>, vector<1x64xf32>
    %14 = vector.broadcast %5 : vector<8x1xf32> to vector<8x64xf32>
    %15 = vector.broadcast %13 : vector<1x64xf32> to vector<8x64xf32>
    %16 = arith.mulf %14, %15 : vector<8x64xf32>
    %17 = arith.addf %12, %16 : vector<8x64xf32>
    %18 = vector.extract_strided_slice %6 {offsets = [0, 0], sizes = [8, 1], strides = [1, 1]} : vector<8x2xf32> to vector<8x1xf32>
    %19 = vector.extract_strided_slice %7 {offsets = [0, 0], sizes = [1, 64], strides = [1, 1]} : vector<2x64xf32> to vector<1x64xf32>
    %20 = vector.broadcast %18 : vector<8x1xf32> to vector<8x64xf32>
    %21 = vector.broadcast %19 : vector<1x64xf32> to vector<8x64xf32>
    %22 = arith.mulf %20, %21 : vector<8x64xf32>
    %23 = arith.addf %17, %22 : vector<8x64xf32>
    %24 = vector.extract_strided_slice %6 {offsets = [0, 1], sizes = [8, 1], strides = [1, 1]} : vector<8x2xf32> to vector<8x1xf32>
    %25 = vector.extract_strided_slice %7 {offsets = [1, 0], sizes = [1, 64], strides = [1, 1]} : vector<2x64xf32> to vector<1x64xf32>
    %26 = vector.broadcast %24 : vector<8x1xf32> to vector<8x64xf32>
    %27 = vector.broadcast %25 : vector<1x64xf32> to vector<8x64xf32>
    %28 = arith.mulf %26, %27 : vector<8x64xf32>
    %29 = arith.addf %23, %28 : vector<8x64xf32>
    %c0_15 = arith.constant 0 : index
    %c0_16 = arith.constant 0 : index
    %30 = vector.load %arg9[%c0_15, %c0_16] : memref<1x64xf32, #tpu.memory_space<vmem>>, vector<1x64xf32>
    %31 = vector.broadcast %30 : vector<1x64xf32> to vector<8x64xf32>
    %32 = arith.addf %29, %31 : vector<8x64xf32>
    %cst_17 = arith.constant 0.000000e+00 : f32
    %33 = vector.broadcast %cst_17 : f32 to vector<8x64xf32>
    %34 = arith.maximumf %32, %33 : vector<8x64xf32>
    %35 = arith.truncf %34 : vector<8x64xf32> to vector<8x64xbf16>
    %c0_18 = arith.constant 0 : index
    %c0_19 = arith.constant 0 : index
    %36 = vector.load %arg10[%c0_18, %c0_19] : memref<64x32xbf16, #tpu.memory_space<vmem>>, vector<64x32xbf16>
    %cst_20 = arith.constant dense<0.000000e+00> : vector<8x32xf32>
    %37 = tpu.matmul %35, %36, %cst_20 {dimension_numbers = #tpu.dot_dimension_numbers<[1], [0], [0], [1], [0, 0, 1, 1], [], []>} : vector<8x64xbf16>, vector<64x32xbf16>, vector<8x32xf32> -> vector<8x32xf32>
    %c0_21 = arith.constant 0 : index
    %c0_22 = arith.constant 0 : index
    %38 = vector.load %arg11[%c0_21, %c0_22] : memref<1x32xf32, #tpu.memory_space<vmem>>, vector<1x32xf32>
    %39 = vector.broadcast %38 : vector<1x32xf32> to vector<8x32xf32>
    %40 = arith.addf %37, %39 : vector<8x32xf32>
    %cst_23 = arith.constant 0.000000e+00 : f32
    %41 = vector.broadcast %cst_23 : f32 to vector<8x32xf32>
    %42 = arith.maximumf %40, %41 : vector<8x32xf32>
    %c0_24 = arith.constant 0 : index
    %c0_25 = arith.constant 0 : index
    %43 = vector.load %arg12[%c0_24, %c0_25] : memref<1x32xf32, #tpu.memory_space<vmem>>, vector<1x32xf32>
    %44 = vector.broadcast %43 : vector<1x32xf32> to vector<8x32xf32>
    %45 = arith.mulf %42, %44 : vector<8x32xf32>
    %cst_26 = arith.constant dense<0.000000e+00> : vector<8xf32>
    %46 = vector.multi_reduction <add>, %45, %cst_26 [1] : vector<8x32xf32> to vector<8xf32>
    %47 = vector.shape_cast %46 : vector<8xf32> to vector<8x1xf32>
    %c0_27 = arith.constant 0 : index
    %c0_28 = arith.constant 0 : index
    %48 = vector.load %arg13[%c0_27, %c0_28] : memref<1x1xf32, #tpu.memory_space<vmem>>, vector<1x1xf32>
    %49 = vector.broadcast %48 : vector<1x1xf32> to vector<8x1xf32>
    %50 = arith.addf %47, %49 : vector<8x1xf32>
    %c0_29 = arith.constant 0 : index
    %c0_30 = arith.constant 0 : index
    %51 = vector.load %arg14[%c0_29, %c0_30] : memref<8x1xf32, #tpu.memory_space<vmem>>, vector<8x1xf32>
    tpu.vector_store %arg14[%c0_29, %c0_30], %50 {strides = array<i32>} : memref<8x1xf32, #tpu.memory_space<vmem>>, vector<8x1xf32>,
    return
  }
  func.func @transform_0(%arg0: i32) -> (i32, i32) {
    %c0_i32 = arith.constant 0 : i32
    %c0_i32_0 = arith.constant 0 : i32
    return %arg0, %c0_i32 : i32, i32
  }
  func.func @transform_1(%arg0: i32) -> (i32, i32) {
    %c0_i32 = arith.constant 0 : i32
    %c0_i32_0 = arith.constant 0 : i32
    return %arg0, %c0_i32 : i32, i32
  }
  func.func @transform_2(%arg0: i32) -> (i32, i32) {
    %c0_i32 = arith.constant 0 : i32
    %c0_i32_0 = arith.constant 0 : i32
    return %arg0, %c0_i32 : i32, i32
  }
  func.func @transform_3(%arg0: i32) -> (i32, i32) {
    %c0_i32 = arith.constant 0 : i32
    %c0_i32_0 = arith.constant 0 : i32
    return %arg0, %c0_i32 : i32, i32
  }
  func.func @transform_4(%arg0: i32) -> (i32, i32) {
    %c0_i32 = arith.constant 0 : i32
    %c0_i32_0 = arith.constant 0 : i32
    %c0_i32_1 = arith.constant 0 : i32
    return %c0_i32, %c0_i32_0 : i32, i32
  }
  func.func @transform_5(%arg0: i32) -> (i32, i32) {
    %c0_i32 = arith.constant 0 : i32
    %c0_i32_0 = arith.constant 0 : i32
    %c0_i32_1 = arith.constant 0 : i32
    return %c0_i32, %c0_i32_0 : i32, i32
  }
  func.func @transform_6(%arg0: i32) -> (i32, i32) {
    %c0_i32 = arith.constant 0 : i32
    %c0_i32_0 = arith.constant 0 : i32
    %c0_i32_1 = arith.constant 0 : i32
    return %c0_i32, %c0_i32_0 : i32, i32
  }
  func.func @transform_7(%arg0: i32) -> (i32, i32) {
    %c0_i32 = arith.constant 0 : i32
    %c0_i32_0 = arith.constant 0 : i32
    %c0_i32_1 = arith.constant 0 : i32
    return %c0_i32, %c0_i32_0 : i32, i32
  }
  func.func @transform_8(%arg0: i32) -> (i32, i32) {
    %c0_i32 = arith.constant 0 : i32
    %c0_i32_0 = arith.constant 0 : i32
    %c0_i32_1 = arith.constant 0 : i32
    return %c0_i32, %c0_i32_0 : i32, i32
  }
  func.func @transform_9(%arg0: i32) -> (i32, i32) {
    %c0_i32 = arith.constant 0 : i32
    %c0_i32_0 = arith.constant 0 : i32
    %c0_i32_1 = arith.constant 0 : i32
    return %c0_i32, %c0_i32_0 : i32, i32
  }
  func.func @transform_10(%arg0: i32) -> (i32, i32) {
    %c0_i32 = arith.constant 0 : i32
    %c0_i32_0 = arith.constant 0 : i32
    %c0_i32_1 = arith.constant 0 : i32
    return %c0_i32, %c0_i32_0 : i32, i32
  }
  func.func @transform_11(%arg0: i32) -> (i32, i32) {
    %c0_i32 = arith.constant 0 : i32
    %c0_i32_0 = arith.constant 0 : i32
    %c0_i32_1 = arith.constant 0 : i32
    return %c0_i32, %c0_i32_0 : i32, i32
  }
  func.func @transform_12(%arg0: i32) -> (i32, i32) {
    %c0_i32 = arith.constant 0 : i32
    %c0_i32_0 = arith.constant 0 : i32
    %c0_i32_1 = arith.constant 0 : i32
    return %c0_i32, %c0_i32_0 : i32, i32
  }
  func.func @transform_13(%arg0: i32) -> (i32, i32) {
    %c0_i32 = arith.constant 0 : i32
    %c0_i32_0 = arith.constant 0 : i32
    return %arg0, %c0_i32 : i32, i32
  }
}

</mosaic_0001>

<llo_original>
// kernel: arrival_time_forward.1
$region0: #{arrival_time_forward.1}
  #allocation0 [shape = 'u32[]', space=smem, size = 0x4, offset = 0x4, fixed_abs, tag = 'smem constant byte address 0x4 - core index']
  #allocation1 [shape = 'u32[72,128]{1,0:T(1,128)}', space=vmem, size = 0x9000, scoped, tag = 'internal scratch']
  #allocation2 [shape = 'f32[1,1]{1,0:T(1,128)S(1)}', space=vmem, size = 0x200, scoped, tag = 'scoped memory for arrival_time_forward.1']
  %s0 = inlined_call_operand.vmem [shape: f32[8,12], index: 0, kind: input, shape index: {}]
  %s1 = inlined_call_operand.vmem [shape: f32[8,1], index: 1, kind: input, shape index: {}]
  %s2 = inlined_call_operand.vmem [shape: f32[8,2], index: 2, kind: input, shape index: {}]
  %s3 = inlined_call_operand.vmem [shape: f32[8,1], index: 3, kind: input, shape index: {}]
  %s4 = inlined_call_operand.vmem [shape: bf16[12,64], index: 4, kind: input, shape index: {}]
  %s5 = inlined_call_operand.vmem [shape: f32[1,64], index: 5, kind: input, shape index: {}]
  %s6 = inlined_call_operand.vmem [shape: f32[2,64], index: 6, kind: input, shape index: {}]
  %s7 = inlined_call_operand.vmem [shape: f32[1,64], index: 7, kind: input, shape index: {}]
  %s8 = inlined_call_operand.vmem [shape: f32[1,64], index: 8, kind: input, shape index: {}]
  %s9 = inlined_call_operand.vmem [shape: bf16[64,32], index: 9, kind: input, shape index: {}]
  %s10 = inlined_call_operand.vmem [shape: f32[1,32], index: 10, kind: input, shape index: {}]
  %s11 = inlined_call_operand.vmem [shape: f32[1,32], index: 11, kind: input, shape index: {}]
  %s12 = inlined_call_operand.<no memory space> [shape: f32[1,1], index: 12, kind: input, shape index: {}]
  %s13 = inlined_call_operand.vmem [shape: f32[8,1], index: 13, kind: output, shape index: {}]
  %s14 = sld [smem:[#allocation0]]
  $region62: #{arrival_time_forward.1} parent=0
    _
  %s16 = ssub.s32 1, %s14
  %s17 = scalar_select 0, %s16, %s14
  %v18 = vstv %s12
  %19 = vst [vmem:[#allocation2] sm:$0x1] %v18
  // Predicated region
  $region2: #{arrival_time_forward.1} parent=0 // pred_check
    _
  $region3: #{arrival_time_forward.1} parent=0 // pred_check_branch
    %21 = sbr.rel (0) target = $region5
  $region4: #{arrival_time_forward.1} parent=0 // pred_region
    _
  $region5: #{arrival_time_forward.1} parent=0 // pred_fallthru
    _
  // Predicated region
  $region6: #{arrival_time_forward.1} parent=0 // pred_check
    _
  $region7: #{arrival_time_forward.1} parent=0 // pred_check_branch
    %23 = sbr.rel (0) target = $region9
  $region8: #{arrival_time_forward.1} parent=0 // pred_region
    _
  $region9: #{arrival_time_forward.1} parent=0 // pred_fallthru
    _
  // Predicated region
  $region10: #{arrival_time_forward.1} parent=0 // pred_check
    _
  $region11: #{arrival_time_forward.1} parent=0 // pred_check_branch
    %25 = sbr.rel (0) target = $region13
  $region12: #{arrival_time_forward.1} parent=0 // pred_region
    _
  $region13: #{arrival_time_forward.1} parent=0 // pred_fallthru
    _
  // Predicated region
  $region14: #{arrival_time_forward.1} parent=0 // pred_check
    _
  $region15: #{arrival_time_forward.1} parent=0 // pred_check_branch
    %27 = sbr.rel (0) target = $region17
  $region16: #{arrival_time_forward.1} parent=0 // pred_region
    _
  $region17: #{arrival_time_forward.1} parent=0 // pred_fallthru
    _
  // Predicated region
  $region18: #{arrival_time_forward.1} parent=0 // pred_check
    _
  $region19: #{arrival_time_forward.1} parent=0 // pred_check_branch
    %29 = sbr.rel (0) target = $region21
  $region20: #{arrival_time_forward.1} parent=0 // pred_region
    _
  $region21: #{arrival_time_forward.1} parent=0 // pred_fallthru
    _
  // Predicated region
  $region22: #{arrival_time_forward.1} parent=0 // pred_check
    _
  $region23: #{arrival_time_forward.1} parent=0 // pred_check_branch
    %31 = sbr.rel (0) target = $region25
  $region24: #{arrival_time_forward.1} parent=0 // pred_region
    _
  $region25: #{arrival_time_forward.1} parent=0 // pred_fallthru
    _
  // Predicated region
  $region26: #{arrival_time_forward.1} parent=0 // pred_check
    _
  $region27: #{arrival_time_forward.1} parent=0 // pred_check_branch
    %33 = sbr.rel (0) target = $region29
  $region28: #{arrival_time_forward.1} parent=0 // pred_region
    _
  $region29: #{arrival_time_forward.1} parent=0 // pred_fallthru
    _
  // Predicated region
  $region30: #{arrival_time_forward.1} parent=0 // pred_check
    _
  $region31: #{arrival_time_forward.1} parent=0 // pred_check_branch
    %35 = sbr.rel (0) target = $region33
  $region32: #{arrival_time_forward.1} parent=0 // pred_region
    _
  $region33: #{arrival_time_forward.1} parent=0 // pred_fallthru
    _
  // Predicated region
  $region34: #{arrival_time_forward.1} parent=0 // pred_check
    _
  $region35: #{arrival_time_forward.1} parent=0 // pred_check_branch
    %37 = sbr.rel (0) target = $region37
  $region36: #{arrival_time_forward.1} parent=0 // pred_region
    _
  $region37: #{arrival_time_forward.1} parent=0 // pred_fallthru
    _
  // Predicated region
  $region38: #{arrival_time_forward.1} parent=0 // pred_check
    _
  $region39: #{arrival_time_forward.1} parent=0 // pred_check_branch
    %39 = sbr.rel (0) target = $region41
  $region40: #{arrival_time_forward.1} parent=0 // pred_region
    _
  $region41: #{arrival_time_forward.1} parent=0 // pred_fallthru
    _
  // Predicated region
  $region42: #{arrival_time_forward.1} parent=0 // pred_check
    _
  $region43: #{arrival_time_forward.1} parent=0 // pred_check_branch
    %41 = sbr.rel (0) target = $region45
  $region44: #{arrival_time_forward.1} parent=0 // pred_region
    _
  $region45: #{arrival_time_forward.1} parent=0 // pred_fallthru
    _
  // Predicated region
  $region46: #{arrival_time_forward.1} parent=0 // pred_check
    _
  $region47: #{arrival_time_forward.1} parent=0 // pred_check_branch
    %43 = sbr.rel (0) target = $region49
  $region48: #{arrival_time_forward.1} parent=0 // pred_region
    _
  $region49: #{arrival_time_forward.1} parent=0 // pred_fallthru
    _
  // Predicated region
  $region50: #{arrival_time_forward.1} parent=0 // pred_check
    _
  $region51: #{arrival_time_forward.1} parent=0 // pred_check_branch
    %45 = sbr.rel (0) target = $region53
  $region52: #{arrival_time_forward.1} parent=0 // pred_region
    _
  $region53: #{arrival_time_forward.1} parent=0 // pred_fallthru
    _
  %v47 = vld [vmem:[%s0] sm:$0xff]
  %v48 = vpack.c.bf16 %v47, %v47
  %v49 = vld [vmem:[%s4] sm:$0xf]
  %v50 = vld [vmem:[%s4 + $0x4] sm:$0x3]
  %v51 = vld [vmem:[%s1] sm:$0xff]
  %v52 = vld [vmem:[%s3] sm:$0xff]
  %v53 = vld [vmem:[%s2] sm:$0xff]
  %v54 = vld [vmem:[%s6] sm:$0x3]
  %v55 = vld [vmem:[%s5] sm:$0x1]
  %57 = vset.pattern.permute.xlu0 0
  %58 = vperm.xlu0 %57, %v51
  %v59 = vpop.permute.xlu0 %58
  %v62 = vperm.slane %v55, 0
  %v64 = vmul.f32 %v59, %v62
  %v67 = vunpack.c.l.b16 %v49
  %v68 = vunpack.c.l.b16 %v50
  %v69 = vpack.c.b16 %v68, %v67
  %vm70 = vcmask 97280
  %v72 = vsel %vm70, %v48, 0
  %vm74 = vcmask 1045504
  %v76 = vsel %vm74, %v69, 0
  %78 = vmatpush.bf16.msra.mxu0 0
  %79 = vmatpush.bf16.msra.mxu0 0
  %80 = vmatpush.bf16.msra.mxu0 0
  %81 = vmatpush.bf16.msra.mxu0 0
  %82 = vmatpush.bf16.msra.mxu0 0
  %83 = vmatpush.bf16.msra.mxu0 0
  %84 = vmatpush.bf16.msra.mxu0 0
  %85 = vmatpush.bf16.msra.mxu0 %v76
  %86 = vmatmul.bf16.gmra.mxu0 %v72
  %v87 = vpop.f32.mrf.mxu0
  %v88 = vadd.f32 %v64, %v87
  %v89 = vpop.f32.mrf.mxu0
  %90 = vdwg.mxu0
  %v91 = vld [vmem:[%s7] sm:$0x1]
  %93 = vset.pattern.permute.xlu0 0
  %94 = vperm.xlu0 %93, %v52
  %v95 = vpop.permute.xlu0 %94
  %v98 = vperm.slane %v91, 0
  %v100 = vmul.f32 %v95, %v98
  %v101 = vadd.f32 %v88, %v100
  %103 = vset.pattern.permute.xlu0 0
  %104 = vperm.xlu0 %103, %v53
  %v105 = vpop.permute.xlu0 %104
  %v107 = vperm.slane %v54, 0
  %v108 = vmul.f32 %v105, %v107
  %v109 = vadd.f32 %v101, %v108
  %110 = vset.pattern.permute.xlu0 1
  %111 = vperm.xlu0 %110, %v53
  %v112 = vpop.permute.xlu0 %111
  %v114 = vperm.slane %v54, 1
  %v115 = vmul.f32 %v112, %v114
  %v116 = vadd.f32 %v109, %v115
  %v117 = vld [vmem:[%s8] sm:$0x1]
  %v119 = vperm.slane %v117, 0
  %v121 = vadd.f32 %v116, %v119
  %v122 = vmax.f32 %v121, 0.0
  %v123 = vpack.c.bf16 %v122, %v122
  %v124 = vld [vmem:[%s9] sm:$0xf]
  %v125 = vld [vmem:[%s9 + $0x4] sm:$0xf]
  %v126 = vld [vmem:[%s9 + $0x8] sm:$0xf]
  %v127 = vld [vmem:[%s9 + $0xc] sm:$0xf]
  %v128 = vld [vmem:[%s9 + $0x10] sm:$0xf]
  %v129 = vld [vmem:[%s9 + $0x14] sm:$0xf]
  %v130 = vld [vmem:[%s9 + $0x18] sm:$0xf]
  %v131 = vld [vmem:[%s9 + $0x1c] sm:$0xf]
  %v132 = vld [vmem:[%s10] sm:$0x1]
  %v134 = vperm.slane %v132, 0
  %v144 = vunpack.c.l.b16 %v124
  %v145 = vunpack.c.l.b16 %v125
  %v146 = vunpack.c.l.b16 %v126
  %v147 = vunpack.c.l.b16 %v127
  %v148 = vunpack.c.l.b16 %v128
  %v149 = vunpack.c.l.b16 %v129
  %v150 = vunpack.c.l.b16 %v130
  %v151 = vunpack.c.l.b16 %v131
  %v152 = vpack.c.b16 %v145, %v144
  %v153 = vpack.c.b16 %v147, %v146
  %v154 = vpack.c.b16 %v149, %v148
  %v155 = vpack.c.b16 %v151, %v150
  %vm160 = vcmask 523264
  %v162 = vsel %vm160, %v123, 0
  %164 = vmatpush.bf16.msra.mxu0 0
  %165 = vmatpush.bf16.msra.mxu0 0
  %166 = vmatpush.bf16.msra.mxu0 0
  %167 = vmatpush.bf16.msra.mxu0 0
  %168 = vmatpush.bf16.msra.mxu0 %v155
  %169 = vmatpush.bf16.msra.mxu0 %v154
  %170 = vmatpush.bf16.msra.mxu0 %v153
  %171 = vmatpush.bf16.msra.mxu0 %v152
  %172 = vmatmul.bf16.gmra.mxu0 %v162
  %v173 = vpop.f32.mrf.mxu0
  %v174 = vadd.f32 %v134, %v173
  %v175 = vpop.f32.mrf.mxu0
  %176 = vdwg.mxu0
  %v177 = vmax.f32 %v174, 0.0
  %v178 = vld [vmem:[%s11] sm:$0x1]
  %v180 = vperm.slane %v178, 0
  %v182 = vmul.f32 %v177, %v180
  %vm183 = vcmask 261120
  %v184 = vsel %vm183, %v182, 0.0
  %185 = vadd.xlane.f32.xlu0 %v184
  %v186 = vpop.xlane.xlu0 %185
  %v187 = vld [vmem:[#allocation2] sm:$0x1]
  %v189 = vperm.slane %v187, 0
  %v191 = vadd.f32 %v186, %v189
  %vm192 = vcmask 7168
  %193 = vst.msk [vmem:[%s13] sm:$0xff] %vm192, %v191
  // Predicated region
  $region54: #{arrival_time_forward.1} parent=0 // pred_check
    _
  $region55: #{arrival_time_forward.1} parent=0 // pred_check_branch
    %195 = sbr.rel (0) target = $region57
  $region56: #{arrival_time_forward.1} parent=0 // pred_region
    _
  $region57: #{arrival_time_forward.1} parent=0 // pred_fallthru
    _
  // Predicated region
  $region58: #{arrival_time_forward.1} parent=0 // pred_check
    _
  $region59: #{arrival_time_forward.1} parent=0 // pred_check_branch
    %197 = sbr.rel (0) target = $region61
  $region60: #{arrival_time_forward.1} parent=0 // pred_region
    _
  $region61: #{arrival_time_forward.1} parent=0 // pred_fallthru
    _

</llo_original>
